<compile_context>
chip_gen: v6e
topology: v6e:2x2x1
jax: 0.10.0
libtpu: 0.0.40
codegen_flags: <defaults>
</compile_context>

<pallas_src>
import functools

import jax
import jax.numpy as jnp
from jax.experimental import pallas as pl
from jax.experimental.pallas import tpu as pltpu

_LANE = 128   # lane width (last dim)
_SUBLANE = 8  # sublane width (second-to-last dim)


def _round_up(n, m):
    return (n + m - 1) // m * m


def _mlp_kernel(x_ref, w1_ref, b1_ref, w2_ref, b2_ref, out_ref):
    # fc1: (TB, D_in) @ (D_in, H) + b1 -> ReLU.  Small/unaligned K (= D_in) is
    # zero-padded internally by Mosaic; the activation h never leaves vregs/VMEM.
    h = jnp.dot(x_ref[...], w1_ref[...], preferred_element_type=jnp.float32)
    h = jnp.maximum(h + b1_ref[...], 0.0)                 # b1 is (1, H), broadcasts
    # fc2: (TB, H) @ (H, Op).  Op is lane-padded to 128 so the store is an
    # unmasked, lane-dense vst (the biggest single lever).
    o = jnp.dot(h, w2_ref[...], preferred_element_type=jnp.float32)
    out_ref[...] = (o + b2_ref[...]).astype(out_ref.dtype)


def prepare_params(w1, b1, w2, b2):
    """One-time (init-time) parameter prep — hoisted out of the per-call path.

    Only fc2's output lane (D_out -> 128) is zero-padded; contraction dims
    (D_in, H) keep their natural sizes.  Zero-padded output columns are sliced
    off by the caller.  Weights are stored (in, out), i.e. PyTorch weight.T.
    """
    d_in, h = w1.shape
    h2, d_out = w2.shape
    assert h == h2 and b1.shape == (h,) and b2.shape == (d_out,)
    op = _round_up(d_out, _LANE)
    b1_2d = b1.reshape(1, h)
    w2p = jnp.zeros((h, op), w2.dtype).at[:, :d_out].set(w2)
    b2p = jnp.zeros((1, op), b2.dtype).at[0, :d_out].set(b2)
    return w1, b1_2d, w2p, b2p


def _pick_batch_tile(batch, batch_tile, d_in, op, itemsize):
    """Batch tile: as large as requested, VMEM-capped, sublane-aligned."""
    # Keep the double-buffered x + out slabs well inside the 32 MiB scoped-VMEM
    # default (v7x has only 64 MiB physical VMEM vs 128 MiB on v5e/v6e).
    vmem_budget = 24 * 1024 * 1024
    per_row = 2 * (d_in + op) * itemsize            # 2x: double-buffered DMA
    max_rows = max(_SUBLANE, (vmem_budget // per_row) // _SUBLANE * _SUBLANE)
    tb = min(batch_tile, max_rows, _round_up(batch, _SUBLANE))
    tb = _round_up(tb, _SUBLANE)
    # Best-effort: if the batch spans multiple tiles, prefer an even number of
    # grid steps so v7x's two TensorCores split the "parallel" axis evenly.
    n = -(-batch // tb)
    if n > 1:
        if n % 2 == 1:
            n += 1
        tb = _round_up(-(-batch // n), _SUBLANE)
    return tb


def mynetwork_forward_padded(x, w1, b1, w2p, b2p, *, batch_tile=512):
    """Fused fc1+ReLU+fc2.  Returns the lane-padded (Bp, 128) output slab; the
    caller slices [:B, :D_out] (lazily / fused with downstream consumers)."""
    b, d_in = x.shape
    h = w1.shape[1]
    op = w2p.shape[1]
    itemsize = jnp.dtype(x.dtype).itemsize

    tb = _pick_batch_tile(b, batch_tile, d_in, op, itemsize)
    bp = _round_up(b, tb)

    # Only per-call wrapper op: a batch pad of x, skipped when B is tile-aligned
    # (e.g. at the demo B=8 this is a no-op and x is passed straight through).
    xp = x if bp == b else jnp.zeros((bp, d_in), x.dtype).at[:b].set(x)

    grid = (bp // tb,)

    # Advisory cost estimate with the actual (padded) DMA byte counts.
    cost = pl.CostEstimate(
        flops=2 * bp * (d_in * h + h * op),
        transcendentals=0,
        bytes_accessed=itemsize
        * (bp * d_in + w1.size + b1.size + w2p.size + b2p.size + bp * op),
    )

    return pl.pallas_call(
        _mlp_kernel,
        out_shape=jax.ShapeDtypeStruct((bp, op), x.dtype),
        grid=grid,
        in_specs=[
            # x: tiled over the batch axis; lane dim = D_in (== full array), so
            # no lane padding and a minimal DMA per tile.
            pl.BlockSpec((tb, d_in), lambda i: (i, 0)),
            # Weights / biases: constant index_map -> fetched once, VMEM-resident
            # across all batch tiles (never re-DMA'd).
            pl.BlockSpec((d_in, h), lambda i: (0, 0)),
            pl.BlockSpec((1, h), lambda i: (0, 0)),
            pl.BlockSpec((h, op), lambda i: (0, 0)),
            pl.BlockSpec((1, op), lambda i: (0, 0)),
        ],
        out_specs=pl.BlockSpec((tb, op), lambda i: (i, 0)),
        compiler_params=pltpu.CompilerParams(
            dimension_semantics=("parallel",),
        ),
        cost_estimate=cost,
    )(xp, w1, b1, w2p, b2p)


def mynetwork_forward(x, w1, b1, w2p, b2p, d_out, *, batch_tile=512):
    """Convenience wrapper returning the logical (B, D_out) result."""
    out_p = mynetwork_forward_padded(x, w1, b1, w2p, b2p, batch_tile=batch_tile)
    return out_p[: x.shape[0], :d_out]


def _init_linear(key, in_features, out_features, dtype=jnp.float32):
    """Deterministic init mimicking nn.Linear's uniform(-1/sqrt(in), 1/sqrt(in))."""
    kw, kb = jax.random.split(key)
    bound = 1.0 / jnp.sqrt(jnp.asarray(in_features, dtype))
    # Stored as (in_features, out_features), i.e. transpose of PyTorch's weight.
    w = jax.random.uniform(kw, (in_features, out_features), dtype, -bound, bound)
    b = jax.random.uniform(kb, (out_features,), dtype, -bound, bound)
    return w, b


def reference_forward(x, w1, b1, w2, b2):
    h = jnp.maximum(x @ w1 + b1, 0.0)
    return h @ w2 + b2


if __name__ == "__main__":
    # "previous 5 days closing price" -> input_dim=5; hidden=32; output_dim=2.
    batch, input_dim, hidden_dim, output_dim = 8, 5, 32, 2

    key = jax.random.PRNGKey(0)
    kx, k1, k2 = jax.random.split(key, 3)

    x = jax.random.normal(kx, (batch, input_dim), jnp.float32)
    w1, b1 = _init_linear(k1, input_dim, hidden_dim)
    w2, b2 = _init_linear(k2, hidden_dim, output_dim)

    # One-time parameter prep (all padding hoisted out of the per-call path).
    w1r, b1r, w2r, b2r = prepare_params(w1, b1, w2, b2)

    fwd = jax.jit(functools.partial(mynetwork_forward_padded, batch_tile=512))
    out_padded = jax.block_until_ready(fwd(x, w1r, b1r, w2r, b2r))

    # Caller-side slice of the lane-padded slab (fusable with downstream ops).
    out = out_padded[:batch, :output_dim]

    ref = reference_forward(x, w1, b1, w2, b2)
    assert out.shape == (batch, output_dim)
    assert jnp.allclose(out, ref, atol=1e-5, rtol=1e-5)

    print("KERNEL_OK")
</pallas_src>

<mosaic_0001>
module attributes {stable_mosaic.version = 11 : i64} {
  func.func @_mlp_kernel(%arg0: i32, %arg1: memref<8x5xf32, #tpu.memory_space<vmem>>, %arg2: memref<5x32xf32, #tpu.memory_space<vmem>>, %arg3: memref<1x32xf32, #tpu.memory_space<vmem>>, %arg4: memref<32x128xf32, #tpu.memory_space<vmem>>, %arg5: memref<1x128xf32, #tpu.memory_space<vmem>>, %arg6: memref<8x128xf32, #tpu.memory_space<vmem>>) attributes {dimension_semantics = [#tpu.dimension_semantics<parallel>], iteration_bounds = array<i64: 1>, scalar_prefetch = 0 : i64, scratch_operands = 0 : i64, tpu.core_type = #tpu.core_type<tc>, window_params = [{transform_indices = @transform_0, window_bounds = array<i64: 8, 5>}, {pipeline_mode = #tpu.pipeline_mode<synchronous>, transform_indices = @transform_1, window_bounds = array<i64: 5, 32>}, {pipeline_mode = #tpu.pipeline_mode<synchronous>, transform_indices = @transform_2, window_bounds = array<i64: 1, 32>}, {pipeline_mode = #tpu.pipeline_mode<synchronous>, transform_indices = @transform_3, window_bounds = array<i64: 32, 128>}, {pipeline_mode = #tpu.pipeline_mode<synchronous>, transform_indices = @transform_4, window_bounds = array<i64: 1, 128>}, {transform_indices = @transform_5, window_bounds = array<i64: 8, 128>}]} {
    %c0 = arith.constant 0 : index
    %c0_0 = arith.constant 0 : index
    %0 = vector.load %arg1[%c0, %c0_0] : memref<8x5xf32, #tpu.memory_space<vmem>>, vector<8x5xf32>
    %c0_1 = arith.constant 0 : index
    %c0_2 = arith.constant 0 : index
    %1 = vector.load %arg2[%c0_1, %c0_2] : memref<5x32xf32, #tpu.memory_space<vmem>>, vector<5x32xf32>
    %cst = arith.constant dense<0.000000e+00> : vector<8x32xf32>
    %2 = tpu.matmul %0, %1, %cst {dimension_numbers = #tpu.dot_dimension_numbers<[1], [0], [0], [1], [0, 0, 1, 1], [], []>} : vector<8x5xf32>, vector<5x32xf32>, vector<8x32xf32> -> vector<8x32xf32>
    %c0_3 = arith.constant 0 : index
    %c0_4 = arith.constant 0 : index
    %3 = vector.load %arg3[%c0_3, %c0_4] : memref<1x32xf32, #tpu.memory_space<vmem>>, vector<1x32xf32>
    %4 = vector.broadcast %3 : vector<1x32xf32> to vector<8x32xf32>
    %5 = arith.addf %2, %4 : vector<8x32xf32>
    %cst_5 = arith.constant 0.000000e+00 : f32
    %6 = vector.broadcast %cst_5 : f32 to vector<8x32xf32>
    %7 = arith.maximumf %5, %6 : vector<8x32xf32>
    %c0_6 = arith.constant 0 : index
    %c0_7 = arith.constant 0 : index
    %8 = vector.load %arg4[%c0_6, %c0_7] : memref<32x128xf32, #tpu.memory_space<vmem>>, vector<32x128xf32>
    %cst_8 = arith.constant dense<0.000000e+00> : vector<8x128xf32>
    %9 = tpu.matmul %7, %8, %cst_8 {dimension_numbers = #tpu.dot_dimension_numbers<[1], [0], [0], [1], [0, 0, 1, 1], [], []>} : vector<8x32xf32>, vector<32x128xf32>, vector<8x128xf32> -> vector<8x128xf32>
    %c0_9 = arith.constant 0 : index
    %c0_10 = arith.constant 0 : index
    %10 = vector.load %arg5[%c0_9, %c0_10] : memref<1x128xf32, #tpu.memory_space<vmem>>, vector<1x128xf32>
    %11 = vector.broadcast %10 : vector<1x128xf32> to vector<8x128xf32>
    %12 = arith.addf %9, %11 : vector<8x128xf32>
    %c0_11 = arith.constant 0 : index
    %c0_12 = arith.constant 0 : index
    %13 = vector.load %arg6[%c0_11, %c0_12] : memref<8x128xf32, #tpu.memory_space<vmem>>, vector<8x128xf32>
    tpu.vector_store %arg6[%c0_11, %c0_12], %12 {strides = array<i32>} : memref<8x128xf32, #tpu.memory_space<vmem>>, vector<8x128xf32>,
    return
  }
  func.func @transform_0(%arg0: i32) -> (i32, i32) {
    %c0_i32 = arith.constant 0 : i32
    %c0_i32_0 = arith.constant 0 : i32
    return %arg0, %c0_i32 : i32, i32
  }
  func.func @transform_1(%arg0: i32) -> (i32, i32) {
    %c0_i32 = arith.constant 0 : i32
    %c0_i32_0 = arith.constant 0 : i32
    %c0_i32_1 = arith.constant 0 : i32
    return %c0_i32, %c0_i32_0 : i32, i32
  }
  func.func @transform_2(%arg0: i32) -> (i32, i32) {
    %c0_i32 = arith.constant 0 : i32
    %c0_i32_0 = arith.constant 0 : i32
    %c0_i32_1 = arith.constant 0 : i32
    return %c0_i32, %c0_i32_0 : i32, i32
  }
  func.func @transform_3(%arg0: i32) -> (i32, i32) {
    %c0_i32 = arith.constant 0 : i32
    %c0_i32_0 = arith.constant 0 : i32
    %c0_i32_1 = arith.constant 0 : i32
    return %c0_i32, %c0_i32_0 : i32, i32
  }
  func.func @transform_4(%arg0: i32) -> (i32, i32) {
    %c0_i32 = arith.constant 0 : i32
    %c0_i32_0 = arith.constant 0 : i32
    %c0_i32_1 = arith.constant 0 : i32
    return %c0_i32, %c0_i32_0 : i32, i32
  }
  func.func @transform_5(%arg0: i32) -> (i32, i32) {
    %c0_i32 = arith.constant 0 : i32
    %c0_i32_0 = arith.constant 0 : i32
    return %arg0, %c0_i32 : i32, i32
  }
}

</mosaic_0001>

<llo_original>
// kernel: mynetwork_forward_padded.1
$region0: #{mynetwork_forward_padded.1}
  #allocation0 [shape = 'u32[]', space=smem, size = 0x4, offset = 0x4, fixed_abs, tag = 'smem constant byte address 0x4 - core index']
  #allocation1 [shape = 'u32[144,128]{1,0:T(1,128)}', space=vmem, size = 0x12000, scoped, tag = 'internal scratch']
  %s0 = inlined_call_operand.hbm [shape: f32[8,5], index: 0, kind: input, shape index: {}]
  %s1 = inlined_call_operand.hbm [shape: f32[5,32], index: 1, kind: input, shape index: {}]
  %s2 = inlined_call_operand.vmem [shape: f32[1,32], index: 2, kind: input, shape index: {}]
  %s3 = inlined_call_operand.hbm [shape: f32[32,128], index: 3, kind: input, shape index: {}]
  %s4 = inlined_call_operand.vmem [shape: f32[1,128], index: 4, kind: input, shape index: {}]
  %s5 = inlined_call_operand.hbm [shape: f32[8,128], index: 5, kind: output, shape index: {}]
  %s6 = sld [smem:[#allocation0]]
  $region42: #{mynetwork_forward_padded.1} parent=0
    _
  %s8 = ssub.s32 1, %s6
  %s9 = scalar_select 0, %s8, %s6
  $region1: #{mynetwork_forward_padded.1} parent=0
    #allocation2 [shape = 'u8[4096]{0}', space=vmem, size = 0x1000, scoped, tag = 'input window, operand 0, single buffered']
    #allocation3 [shape = 's32[1]{0}', space=sflag, size = 0x4, scoped, tag = 'scoped memory for mynetwork_forward_padded.1']
    #allocation4 [shape = 's32[1]{0}', space=sflag, size = 0x4, scoped, tag = 'scoped memory for mynetwork_forward_padded.1']
    #allocation5 [shape = 'u8[4096]{0}', space=vmem, size = 0x1000, scoped, tag = 'input window, operand 1, single buffered']
    #allocation6 [shape = 's32[1]{0}', space=sflag, size = 0x4, scoped, tag = 'scoped memory for mynetwork_forward_padded.1']
    #allocation7 [shape = 'u8[16384]{0}', space=vmem, size = 0x4000, scoped, tag = 'input window, operand 3, single buffered']
    #allocation8 [shape = 'u8[4096]{0}', space=vmem, size = 0x1000, scoped, tag = 'output window, operand 0, single buffered']
    %10 = vsyncpa [#allocation3], 0
    %11 = vsyncpa [#allocation6], 0
    %12 = vsyncpa [#allocation4], 0
    // Predicated region
    $region2: #{mynetwork_forward_padded.1} parent=1 // pred_check
      _
    $region3: #{mynetwork_forward_padded.1} parent=1 // pred_check_branch
      %14 = sbr.rel (0) target = $region5
    $region4: #{mynetwork_forward_padded.1} parent=1 // pred_region
      %s16 = ssub.s32 128, 128
      %17 = vsyncadd [#allocation3], %s16
      %s19 = sshll.u32 [#allocation2], 4
      %s20 = int_to_ptr.vmem [resolvable:$true] %s19
      %22 = dma.hbm_to_vmem [thread:$0]  %s0, 128, %s20, [#allocation3]
    $region5: #{mynetwork_forward_padded.1} parent=1 // pred_fallthru
      _
    // Predicated region
    $region6: #{mynetwork_forward_padded.1} parent=1 // pred_check
      _
    $region7: #{mynetwork_forward_padded.1} parent=1 // pred_check_branch
      %24 = sbr.rel (0) target = $region9
    $region8: #{mynetwork_forward_padded.1} parent=1 // pred_region
      %s26 = ssub.s32 128, 128
      %27 = vsyncadd [#allocation6], %s26
      %s29 = sshll.u32 [#allocation5], 4
      %s30 = int_to_ptr.vmem [resolvable:$true] %s29
      %32 = dma.hbm_to_vmem [thread:$0]  %s1, 128, %s30, [#allocation6]
    $region9: #{mynetwork_forward_padded.1} parent=1 // pred_fallthru
      _
    // Predicated region
    $region10: #{mynetwork_forward_padded.1} parent=1 // pred_check
      _
    $region11: #{mynetwork_forward_padded.1} parent=1 // pred_check_branch
      %34 = sbr.rel (0) target = $region13
    $region12: #{mynetwork_forward_padded.1} parent=1 // pred_region
      _
    $region13: #{mynetwork_forward_padded.1} parent=1 // pred_fallthru
      _
    // Predicated region
    $region14: #{mynetwork_forward_padded.1} parent=1 // pred_check
      _
    $region15: #{mynetwork_forward_padded.1} parent=1 // pred_check_branch
      %36 = sbr.rel (0) target = $region17
    $region16: #{mynetwork_forward_padded.1} parent=1 // pred_region
      %s38 = ssub.s32 512, 512
      %39 = vsyncadd [#allocation6], %s38
      %s40 = sshll.u32 [#allocation7], 4
      %s41 = int_to_ptr.vmem [resolvable:$true] %s40
      %46 = dma.hbm_to_vmem [thread:$0]  %s3, 512, %s41, [#allocation6], 128, 128, 8
    $region17: #{mynetwork_forward_padded.1} parent=1 // pred_fallthru
      _
    // Predicated region
    $region18: #{mynetwork_forward_padded.1} parent=1 // pred_check
      _
    $region19: #{mynetwork_forward_padded.1} parent=1 // pred_check_branch
      %48 = sbr.rel (0) target = $region21
    $region20: #{mynetwork_forward_padded.1} parent=1 // pred_region
      _
    $region21: #{mynetwork_forward_padded.1} parent=1 // pred_fallthru
      _
    // Predicated region
    $region22: #{mynetwork_forward_padded.1} parent=1 // pred_check
      _
    $region23: #{mynetwork_forward_padded.1} parent=1 // pred_check_branch
      %50 = sbr.rel (0) target = $region25
    $region24: #{mynetwork_forward_padded.1} parent=1 // pred_region
      %51 = dma.done [#allocation3], 128
    $region25: #{mynetwork_forward_padded.1} parent=1 // pred_fallthru
      _
    // Predicated region
    $region26: #{mynetwork_forward_padded.1} parent=1 // pred_check
      _
    $region27: #{mynetwork_forward_padded.1} parent=1 // pred_check_branch
      %53 = sbr.rel (0) target = $region29
    $region28: #{mynetwork_forward_padded.1} parent=1 // pred_region
      %54 = dma.done [#allocation6], 128
    $region29: #{mynetwork_forward_padded.1} parent=1 // pred_fallthru
      _
    // Predicated region
    $region30: #{mynetwork_forward_padded.1} parent=1 // pred_check
      _
    $region31: #{mynetwork_forward_padded.1} parent=1 // pred_check_branch
      %56 = sbr.rel (0) target = $region33
    $region32: #{mynetwork_forward_padded.1} parent=1 // pred_region
      %57 = dma.done [#allocation6], 512
    $region33: #{mynetwork_forward_padded.1} parent=1 // pred_fallthru
      _
    %v58 = vld [vmem:[#allocation2] sm:$0xff]
    %v59 = vld [vmem:[#allocation5] sm:$0x1f]
    %v60 = vld [vmem:[%s2] sm:$0x1]
    %v62 = vlaneseq
    %v63 = vshrl.u32 %v62, 7
    %v64 = vsub.s32 0, %v63
    %v65 = vrot.slane %v60, %v64
    %vm67 = vcmask 39936
    %v69 = vsel %vm67, %v58, 0
    %vm71 = vcmask 1044480
    %v73 = vsel %vm71, %v59, 0
    %75 = vmatprep.subr.mxu0 0.0
    %76 = vmatpush1.msra.mxu0 0.0
    %77 = vmatprep.subr.mxu0 0.0
    %78 = vmatpush1.msra.mxu0 0.0
    %79 = vmatprep.subr.mxu0 0.0
    %80 = vmatpush1.msra.mxu0 0.0
    %81 = vmatprep.subr.mxu0 0.0
    %82 = vmatpush1.msra.mxu0 0.0
    %83 = vmatprep.subr.mxu0 0.0
    %84 = vmatpush1.msra.mxu0 0.0
    %85 = vmatprep.subr.mxu0 0.0
    %86 = vmatpush1.msra.mxu0 0.0
    %87 = vmatprep.subr.mxu0 0.0
    %88 = vmatpush1.msra.mxu0 0.0
    %89 = vmatprep.subr.mxu0 0.0
    %90 = vmatpush1.msra.mxu0 0.0
    %91 = vmatprep.subr.mxu0 0.0
    %92 = vmatpush1.msra.mxu0 0.0
    %93 = vmatprep.subr.mxu0 0.0
    %94 = vmatpush1.msra.mxu0 0.0
    %95 = vmatprep.subr.mxu0 0.0
    %96 = vmatpush1.msra.mxu0 0.0
    %97 = vmatprep.subr.mxu0 0.0
    %98 = vmatpush1.msra.mxu0 0.0
    %99 = vmatprep.subr.mxu0 0.0
    %100 = vmatpush1.msra.mxu0 0.0
    %101 = vmatprep.subr.mxu0 0.0
    %102 = vmatpush1.msra.mxu0 0.0
    %103 = vmatprep.subr.mxu0 0.0
    %104 = vmatpush1.msra.mxu0 0.0
    %105 = vmatprep.subr.mxu0 0.0
    %106 = vmatpush1.msra.mxu0 %v73
    %107 = vmatprep.subr.mxu0 0.0
    %108 = vmatpush2.msra.mxu0 0.0
    %109 = vmatprep.subr.mxu0 0.0
    %110 = vmatpush2.msra.mxu0 0.0
    %111 = vmatprep.subr.mxu0 0.0
    %112 = vmatpush2.msra.mxu0 0.0
    %113 = vmatprep.subr.mxu0 0.0
    %114 = vmatpush2.msra.mxu0 0.0
    %115 = vmatprep.subr.mxu0 0.0
    %116 = vmatpush2.msra.mxu0 0.0
    %117 = vmatprep.subr.mxu0 0.0
    %118 = vmatpush2.msra.mxu0 0.0
    %119 = vmatprep.subr.mxu0 0.0
    %120 = vmatpush2.msra.mxu0 0.0
    %121 = vmatprep.subr.mxu0 0.0
    %122 = vmatpush2.msra.mxu0 0.0
    %123 = vmatprep.subr.mxu0 0.0
    %124 = vmatpush2.msra.mxu0 0.0
    %125 = vmatprep.subr.mxu0 0.0
    %126 = vmatpush2.msra.mxu0 0.0
    %127 = vmatprep.subr.mxu0 0.0
    %128 = vmatpush2.msra.mxu0 0.0
    %129 = vmatprep.subr.mxu0 0.0
    %130 = vmatpush2.msra.mxu0 0.0
    %131 = vmatprep.subr.mxu0 0.0
    %132 = vmatpush2.msra.mxu0 0.0
    %133 = vmatprep.subr.mxu0 0.0
    %134 = vmatpush2.msra.mxu0 0.0
    %135 = vmatprep.subr.mxu0 0.0
    %136 = vmatpush2.msra.mxu0 0.0
    %137 = vmatprep.subr.mxu0 0.0
    %138 = vmatpush2.msra.mxu0 0.0
    %139 = vmatprep.mubr.f32.mxu0 0.0
    %140 = vmatmul.mubr.f32.gmra.mxu0 %v69
    %v141 = vpop.f32.mrf.mxu0
    %v142 = vadd.f32 %v65, %v141
    %v143 = vpop.f32.mrf.mxu0
    %144 = vdwg.mxu0
    %v145 = vmax.f32 %v142, 0.0
    %v146 = vld [vmem:[#allocation7] sm:$0xff]
    %v147 = vld [vmem:[#allocation7 + $0x8] sm:$0xff]
    %v148 = vld [vmem:[#allocation7 + $0x10] sm:$0xff]
    %v149 = vld [vmem:[#allocation7 + $0x18] sm:$0xff]
    %v150 = vld [vmem:[%s4] sm:$0x1]
    %v152 = vlaneseq
    %v153 = vshrl.u32 %v152, 7
    %v154 = vsub.s32 0, %v153
    %v155 = vrot.slane %v150, %v154
    %vm157 = vcmask 261120
    %v159 = vsel %vm157, %v145, 0
    %161 = vmatprep.subr.mxu0 0.0
    %162 = vmatpush1.msra.mxu0 0.0
    %163 = vmatprep.subr.mxu0 0.0
    %164 = vmatpush1.msra.mxu0 0.0
    %165 = vmatprep.subr.mxu0 0.0
    %166 = vmatpush1.msra.mxu0 0.0
    %167 = vmatprep.subr.mxu0 0.0
    %168 = vmatpush1.msra.mxu0 0.0
    %169 = vmatprep.subr.mxu0 0.0
    %170 = vmatpush1.msra.mxu0 0.0
    %171 = vmatprep.subr.mxu0 0.0
    %172 = vmatpush1.msra.mxu0 0.0
    %173 = vmatprep.subr.mxu0 0.0
    %174 = vmatpush1.msra.mxu0 0.0
    %175 = vmatprep.subr.mxu0 0.0
    %176 = vmatpush1.msra.mxu0 0.0
    %177 = vmatprep.subr.mxu0 0.0
    %178 = vmatpush1.msra.mxu0 0.0
    %179 = vmatprep.subr.mxu0 0.0
    %180 = vmatpush1.msra.mxu0 0.0
    %181 = vmatprep.subr.mxu0 0.0
    %182 = vmatpush1.msra.mxu0 0.0
    %183 = vmatprep.subr.mxu0 0.0
    %184 = vmatpush1.msra.mxu0 0.0
    %185 = vmatprep.subr.mxu0 0.0
    %186 = vmatpush1.msra.mxu0 %v149
    %187 = vmatprep.subr.mxu0 0.0
    %188 = vmatpush1.msra.mxu0 %v148
    %189 = vmatprep.subr.mxu0 0.0
    %190 = vmatpush1.msra.mxu0 %v147
    %191 = vmatprep.subr.mxu0 0.0
    %192 = vmatpush1.msra.mxu0 %v146
    %193 = vmatprep.subr.mxu0 0.0
    %194 = vmatpush2.msra.mxu0 0.0
    %195 = vmatprep.subr.mxu0 0.0
    %196 = vmatpush2.msra.mxu0 0.0
    %197 = vmatprep.subr.mxu0 0.0
    %198 = vmatpush2.msra.mxu0 0.0
    %199 = vmatprep.subr.mxu0 0.0
    %200 = vmatpush2.msra.mxu0 0.0
    %201 = vmatprep.subr.mxu0 0.0
    %202 = vmatpush2.msra.mxu0 0.0
    %203 = vmatprep.subr.mxu0 0.0
    %204 = vmatpush2.msra.mxu0 0.0
    %205 = vmatprep.subr.mxu0 0.0
    %206 = vmatpush2.msra.mxu0 0.0
    %207 = vmatprep.subr.mxu0 0.0
    %208 = vmatpush2.msra.mxu0 0.0
    %209 = vmatprep.subr.mxu0 0.0
    %210 = vmatpush2.msra.mxu0 0.0
    %211 = vmatprep.subr.mxu0 0.0
    %212 = vmatpush2.msra.mxu0 0.0
    %213 = vmatprep.subr.mxu0 0.0
    %214 = vmatpush2.msra.mxu0 0.0
    %215 = vmatprep.subr.mxu0 0.0
    %216 = vmatpush2.msra.mxu0 0.0
    %217 = vmatprep.subr.mxu0 0.0
    %218 = vmatpush2.msra.mxu0 0.0
    %219 = vmatprep.subr.mxu0 0.0
    %220 = vmatpush2.msra.mxu0 0.0
    %221 = vmatprep.subr.mxu0 0.0
    %222 = vmatpush2.msra.mxu0 0.0
    %223 = vmatprep.subr.mxu0 0.0
    %224 = vmatpush2.msra.mxu0 0.0
    %225 = vmatprep.mubr.f32.mxu0 0.0
    %226 = vmatmul.mubr.f32.gmra.mxu0 %v159
    %v227 = vpop.f32.mrf.mxu0
    %v228 = vadd.f32 %v155, %v227
    %v229 = vpop.f32.mrf.mxu0
    %230 = vdwg.mxu0
    %231 = vst [vmem:[#allocation8] sm:$0xff] %v228
    // Predicated region
    $region34: #{mynetwork_forward_padded.1} parent=1 // pred_check
      _
    $region35: #{mynetwork_forward_padded.1} parent=1 // pred_check_branch
      %233 = sbr.rel (0) target = $region37
    $region36: #{mynetwork_forward_padded.1} parent=1 // pred_region
      %s235 = ssub.s32 128, 128
      %236 = vsyncadd [#allocation4], %s235
      %s238 = sshll.u32 [#allocation8], 4
      %s239 = int_to_ptr.vmem [resolvable:$true] %s238
      %241 = dma.vmem_to_hbm [thread:$0]  %s239, 128, %s5, [#allocation4]
    $region37: #{mynetwork_forward_padded.1} parent=1 // pred_fallthru
      _
    // Predicated region
    $region38: #{mynetwork_forward_padded.1} parent=1 // pred_check
      _
    $region39: #{mynetwork_forward_padded.1} parent=1 // pred_check_branch
      %243 = sbr.rel (0) target = $region41
    $region40: #{mynetwork_forward_padded.1} parent=1 // pred_region
      %244 = dma.done [#allocation4], 128
    $region41: #{mynetwork_forward_padded.1} parent=1 // pred_fallthru
      _
    %245 = vsyncpa [#allocation3], 1
    %246 = vsyncpa [#allocation6], 1
    %247 = vsyncpa [#allocation4], 1

</llo_original>
